<compile_context>
chip_gen: v6e
topology: v6e:2x2x1
jax: 0.10.0
libtpu: 0.0.40
codegen_flags: <defaults>
</compile_context>

<pallas_src>
import functools

import jax
import jax.numpy as jnp
from jax.experimental import pallas as pl
from jax.experimental.pallas import tpu as pltpu

LANES = 128


def _round_up(x, m):
    return ((x + m - 1) // m) * m


def _bce_blur_kernel(pred_ref, true_ref, o_ref, acc_ref, *,
                     inv_alpha, inv_n, n_valid, tile_rows):
    i = pl.program_id(0)
    last = pl.num_programs(0) - 1

    @pl.when(i == 0)
    def _():
        acc_ref[...] = jnp.zeros_like(acc_ref)

    x = pred_ref[...].astype(jnp.float32)      # (tile_rows, 128)
    y = true_ref[...].astype(jnp.float32)

    # One exp, reused for both the stable BCE term and the sigmoid.
    e = jnp.exp(-jnp.abs(x))                                   # EUP exp
    bce = jnp.maximum(x, 0.0) - x * y + jnp.log1p(e)           # EUP log1p
    r = 1.0 / (1.0 + e)                                        # EUP recip
    p = jnp.where(x >= 0.0, r, e * r)                          # sigmoid(x)
    dx = p - y
    loss = bce * (1.0 - jnp.exp((dx - 1.0) * inv_alpha))       # EUP exp

    def _accumulate(v):
        # Fold the tile onto a single resident (8,128) vreg accumulator
        # with plain VPU adds (no per-step cross-lane reduce).
        acc_ref[...] += v.reshape(tile_rows // 8, 8, LANES).sum(axis=0)

    @pl.when(i < last)
    def _():
        _accumulate(loss)

    @pl.when(i == last)
    def _():
        # Padding / ragged-tail mask is only needed on the final tile.
        rows_i = jax.lax.broadcasted_iota(jnp.int32, (tile_rows, LANES), 0)
        cols_i = jax.lax.broadcasted_iota(jnp.int32, (tile_rows, LANES), 1)
        flat = (i * tile_rows + rows_i) * LANES + cols_i
        _accumulate(jnp.where(flat < n_valid, loss, 0.0))
        # Single cross-lane/sublane reduce + scalar store in the epilogue.
        o_ref[...] = jnp.sum(acc_ref[...], keepdims=True) * inv_n


def bce_blur_with_logits_loss(pred, true, alpha=0.05, tile_rows=2048):
    """Scalar f32 loss with the same semantics as the PyTorch module."""
    assert pred.shape == true.shape
    n_valid = int(pred.size)
    assert n_valid > 0

    # Minimum sublane tiling for the input dtype (f32:8, bf16/fp16:16, int8/fp8:32).
    itemsize = jnp.dtype(pred.dtype).itemsize
    min_sub = {4: 8, 2: 16, 1: 32}.get(itemsize, 8)

    # Flatten (free). A single tiny zero-pad only if needed so the row count is
    # a multiple of the minimum sublane tile; kernel mask excludes the padding.
    pf = pred.reshape(-1)
    tf = true.reshape(-1)
    padded = _round_up(n_valid, LANES * min_sub)
    if padded != n_valid:
        pf = jnp.pad(pf, (0, padded - n_valid))
        tf = jnp.pad(tf, (0, padded - n_valid))
    rows = padded // LANES
    pf = pf.reshape(rows, LANES)
    tf = tf.reshape(rows, LANES)

    # Effective tile: big, multiple of min_sub, clamped to the array.
    tile_rows = max(min_sub, (int(tile_rows) // min_sub) * min_sub)
    tr = min(tile_rows, rows)
    grid = pl.cdiv(rows, tr)

    kernel = functools.partial(
        _bce_blur_kernel,
        inv_alpha=float(1.0 / (float(alpha) + 1e-4)),
        inv_n=float(1.0 / n_valid),
        n_valid=n_valid,
        tile_rows=tr,
    )

    out = pl.pallas_call(
        kernel,
        out_shape=jax.ShapeDtypeStruct((1, 1), jnp.float32),
        grid=(grid,),
        in_specs=[
            pl.BlockSpec((tr, LANES), lambda i: (i, 0)),
            pl.BlockSpec((tr, LANES), lambda i: (i, 0)),
        ],
        out_specs=pl.BlockSpec((1, 1), lambda i: (0, 0)),
        scratch_shapes=[pltpu.VMEM((8, LANES), jnp.float32)],
        compiler_params=pltpu.CompilerParams(
            dimension_semantics=("arbitrary",)),
    )(pf, tf)
    return out[0, 0]


def _reference(pred, true, alpha=0.05):
    x = pred.astype(jnp.float32)
    y = true.astype(jnp.float32)
    bce = jnp.maximum(x, 0.0) - x * y + jnp.log1p(jnp.exp(-jnp.abs(x)))
    p = jax.nn.sigmoid(x)
    dx = p - y
    af = 1.0 - jnp.exp((dx - 1.0) / (alpha + 1e-4))
    return jnp.mean(bce * af)


if __name__ == "__main__":
    key = jax.random.PRNGKey(0)
    k1, k2 = jax.random.split(key)
    # NCHW logits and binary targets, as the YOLO loss sees per-anchor maps.
    x_shape = (2, 4, 16, 16)
    pred = jax.random.normal(k1, x_shape, dtype=jnp.float32)
    true = (jax.random.uniform(k2, x_shape) > 0.5).astype(jnp.float32)

    out = bce_blur_with_logits_loss(pred, true, alpha=0.05)
    out = jax.block_until_ready(out)

    ref = _reference(pred, true, alpha=0.05)
    assert jnp.allclose(out, ref, rtol=1e-5, atol=1e-5), (out, ref)
    print("KERNEL_OK")
</pallas_src>

<mosaic_0001>
module attributes {stable_mosaic.version = 11 : i64} {
  func.func @_bce_blur_kernel(%arg0: i32, %arg1: memref<16x128xf32, #tpu.memory_space<vmem>>, %arg2: memref<16x128xf32, #tpu.memory_space<vmem>>, %arg3: memref<1x1xf32, #tpu.memory_space<vmem>>, %arg4: memref<8x128xf32, #tpu.memory_space<vmem>>) attributes {dimension_semantics = [#tpu.dimension_semantics<arbitrary>], iteration_bounds = array<i64: 1>, scalar_prefetch = 0 : i64, scratch_operands = 1 : i64, tpu.core_type = #tpu.core_type<tc>, window_params = [{transform_indices = @transform_0, window_bounds = array<i64: 16, 128>}, {transform_indices = @transform_1, window_bounds = array<i64: 16, 128>}, {pipeline_mode = #tpu.pipeline_mode<synchronous>, transform_indices = @transform_2, window_bounds = array<i64: 1, 1>}]} {
    %c0_i32 = arith.constant 0 : i32
    %0 = arith.cmpi eq, %arg0, %c0_i32 : i32
    %1 = arith.extui %0 : i1 to i32
    %c0_i32_0 = arith.constant 0 : i32
    %2 = arith.cmpi ne, %1, %c0_i32_0 : i32
    scf.if %2 {
      %cst_15 = arith.constant 0.000000e+00 : f32
      %38 = vector.broadcast %cst_15 : f32 to vector<8x128xf32>
      %c0_16 = arith.constant 0 : index
      %c0_17 = arith.constant 0 : index
      %39 = vector.load %arg4[%c0_16, %c0_17] : memref<8x128xf32, #tpu.memory_space<vmem>>, vector<8x128xf32>
      tpu.vector_store %arg4[%c0_16, %c0_17], %38 {strides = array<i32>} : memref<8x128xf32, #tpu.memory_space<vmem>>, vector<8x128xf32>,
    } else {
    }
    %c0 = arith.constant 0 : index
    %c0_1 = arith.constant 0 : index
    %3 = vector.load %arg1[%c0, %c0_1] : memref<16x128xf32, #tpu.memory_space<vmem>>, vector<16x128xf32>
    %c0_2 = arith.constant 0 : index
    %c0_3 = arith.constant 0 : index
    %4 = vector.load %arg2[%c0_2, %c0_3] : memref<16x128xf32, #tpu.memory_space<vmem>>, vector<16x128xf32>
    %5 = math.absf %3 : vector<16x128xf32>
    %cst = arith.constant 0.000000e+00 : f32
    %6 = vector.broadcast %cst : f32 to vector<16x128xf32>
    %7 = arith.subf %6, %5 : vector<16x128xf32>
    %8 = math.exp %7 : vector<16x128xf32>
    %cst_4 = arith.constant 0.000000e+00 : f32
    %9 = vector.broadcast %cst_4 : f32 to vector<16x128xf32>
    %10 = arith.maximumf %3, %9 : vector<16x128xf32>
    %11 = arith.mulf %3, %4 : vector<16x128xf32>
    %12 = arith.subf %10, %11 : vector<16x128xf32>
    %13 = math.log1p %8 : vector<16x128xf32>
    %14 = arith.addf %12, %13 : vector<16x128xf32>
    %cst_5 = arith.constant 1.000000e+00 : f32
    %15 = vector.broadcast %cst_5 : f32 to vector<16x128xf32>
    %16 = arith.addf %15, %8 : vector<16x128xf32>
    %cst_6 = arith.constant 1.000000e+00 : f32
    %17 = vector.broadcast %cst_6 : f32 to vector<16x128xf32>
    %18 = arith.divf %17, %16 : vector<16x128xf32>
    %cst_7 = arith.constant 0.000000e+00 : f32
    %19 = vector.broadcast %cst_7 : f32 to vector<16x128xf32>
    %20 = arith.cmpf oge, %3, %19 : vector<16x128xf32>
    %21 = arith.mulf %8, %18 : vector<16x128xf32>
    %22 = arith.select %20, %18, %21 : vector<16x128xi1>, vector<16x128xf32>
    %23 = arith.subf %22, %4 : vector<16x128xf32>
    %cst_8 = arith.constant 1.000000e+00 : f32
    %24 = vector.broadcast %cst_8 : f32 to vector<16x128xf32>
    %25 = arith.subf %23, %24 : vector<16x128xf32>
    %cst_9 = arith.constant 19.9600792 : f32
    %26 = vector.broadcast %cst_9 : f32 to vector<16x128xf32>
    %27 = arith.mulf %25, %26 : vector<16x128xf32>
    %28 = math.exp %27 : vector<16x128xf32>
    %cst_10 = arith.constant 1.000000e+00 : f32
    %29 = vector.broadcast %cst_10 : f32 to vector<16x128xf32>
    %30 = arith.subf %29, %28 : vector<16x128xf32>
    %31 = arith.mulf %14, %30 : vector<16x128xf32>
    %c0_i32_11 = arith.constant 0 : i32
    %32 = arith.cmpi slt, %arg0, %c0_i32_11 : i32
    %33 = arith.extui %32 : i1 to i32
    %c0_i32_12 = arith.constant 0 : i32
    %34 = arith.cmpi ne, %33, %c0_i32_12 : i32
    scf.if %34 {
      %c0_15 = arith.constant 0 : index
      %c0_16 = arith.constant 0 : index
      %38 = vector.load %arg4[%c0_15, %c0_16] : memref<8x128xf32, #tpu.memory_space<vmem>>, vector<8x128xf32>
      %39 = vector.shape_cast %31 : vector<16x128xf32> to vector<2x8x128xf32>
      %cst_17 = arith.constant dense<0.000000e+00> : vector<8x128xf32>
      %40 = vector.multi_reduction <add>, %39, %cst_17 [0] : vector<2x8x128xf32> to vector<8x128xf32>
      %41 = arith.addf %38, %40 : vector<8x128xf32>
      %c0_18 = arith.constant 0 : index
      %c0_19 = arith.constant 0 : index
      %42 = vector.load %arg4[%c0_18, %c0_19] : memref<8x128xf32, #tpu.memory_space<vmem>>, vector<8x128xf32>
      tpu.vector_store %arg4[%c0_18, %c0_19], %41 {strides = array<i32>} : memref<8x128xf32, #tpu.memory_space<vmem>>, vector<8x128xf32>,
    } else {
    }
    %c0_i32_13 = arith.constant 0 : i32
    %35 = arith.cmpi eq, %arg0, %c0_i32_13 : i32
    %36 = arith.extui %35 : i1 to i32
    %c0_i32_14 = arith.constant 0 : i32
    %37 = arith.cmpi ne, %36, %c0_i32_14 : i32
    scf.if %37 {
      %38 = tpu.iota {dimensions = array<i32: 0>} : vector<16x128xi32>
      %39 = tpu.iota {dimensions = array<i32: 1>} : vector<16x128xi32>
      %c16_i32 = arith.constant 16 : i32
      %40 = arith.muli %arg0, %c16_i32 : i32
      %41 = vector.broadcast %40 : i32 to vector<16x128xi32>
      %42 = arith.addi %41, %38 : vector<16x128xi32>
      %c128_i32 = arith.constant 128 : i32
      %43 = vector.broadcast %c128_i32 : i32 to vector<16x128xi32>
      %44 = arith.muli %42, %43 : vector<16x128xi32>
      %45 = arith.addi %44, %39 : vector<16x128xi32>
      %c2048_i32 = arith.constant 2048 : i32
      %46 = vector.broadcast %c2048_i32 : i32 to vector<16x128xi32>
      %47 = arith.cmpi slt, %45, %46 : vector<16x128xi32>
      %cst_15 = arith.constant 0.000000e+00 : f32
      %48 = vector.broadcast %cst_15 : f32 to vector<16x128xf32>
      %49 = arith.select %47, %31, %48 : vector<16x128xi1>, vector<16x128xf32>
      %c0_16 = arith.constant 0 : index
      %c0_17 = arith.constant 0 : index
      %50 = vector.load %arg4[%c0_16, %c0_17] : memref<8x128xf32, #tpu.memory_space<vmem>>, vector<8x128xf32>
      %51 = vector.shape_cast %49 : vector<16x128xf32> to vector<2x8x128xf32>
      %cst_18 = arith.constant dense<0.000000e+00> : vector<8x128xf32>
      %52 = vector.multi_reduction <add>, %51, %cst_18 [0] : vector<2x8x128xf32> to vector<8x128xf32>
      %53 = arith.addf %50, %52 : vector<8x128xf32>
      %c0_19 = arith.constant 0 : index
      %c0_20 = arith.constant 0 : index
      %54 = vector.load %arg4[%c0_19, %c0_20] : memref<8x128xf32, #tpu.memory_space<vmem>>, vector<8x128xf32>
      tpu.vector_store %arg4[%c0_19, %c0_20], %53 {strides = array<i32>} : memref<8x128xf32, #tpu.memory_space<vmem>>, vector<8x128xf32>,
      %c0_21 = arith.constant 0 : index
      %c0_22 = arith.constant 0 : index
      %55 = vector.load %arg4[%c0_21, %c0_22] : memref<8x128xf32, #tpu.memory_space<vmem>>, vector<8x128xf32>
      %56 = vector.shape_cast %55 : vector<8x128xf32> to vector<1x8x128xf32>
      %cst_23 = arith.constant dense<0.000000e+00> : vector<1xf32>
      %57 = vector.multi_reduction <add>, %56, %cst_23 [1, 2] : vector<1x8x128xf32> to vector<1xf32>
      %58 = vector.shape_cast %57 : vector<1xf32> to vector<1x1x1xf32>
      %59 = vector.extract %58[0, 0, 0] : f32 from vector<1x1x1xf32>
      %60 = vector.broadcast %59 : f32 to vector<1x1xf32>
      %cst_24 = arith.constant 4.8828125E-4 : f32
      %61 = vector.broadcast %cst_24 : f32 to vector<1x1xf32>
      %62 = arith.mulf %60, %61 : vector<1x1xf32>
      %c0_25 = arith.constant 0 : index
      %c0_26 = arith.constant 0 : index
      %63 = vector.load %arg3[%c0_25, %c0_26] : memref<1x1xf32, #tpu.memory_space<vmem>>, vector<1x1xf32>
      tpu.vector_store %arg3[%c0_25, %c0_26], %62 {strides = array<i32>} : memref<1x1xf32, #tpu.memory_space<vmem>>, vector<1x1xf32>,
    } else {
    }
    return
  }
  func.func @transform_0(%arg0: i32) -> (i32, i32) {
    %c0_i32 = arith.constant 0 : i32
    %c0_i32_0 = arith.constant 0 : i32
    return %arg0, %c0_i32 : i32, i32
  }
  func.func @transform_1(%arg0: i32) -> (i32, i32) {
    %c0_i32 = arith.constant 0 : i32
    %c0_i32_0 = arith.constant 0 : i32
    return %arg0, %c0_i32 : i32, i32
  }
  func.func @transform_2(%arg0: i32) -> (i32, i32) {
    %c0_i32 = arith.constant 0 : i32
    %c0_i32_0 = arith.constant 0 : i32
    %c0_i32_1 = arith.constant 0 : i32
    return %c0_i32, %c0_i32_0 : i32, i32
  }
}

</mosaic_0001>

<llo_original>
// kernel: tpu_custom_call.1
$region0: #{tpu_custom_call.1}
  #allocation0 [shape = 'u32[]', space=smem, size = 0x4, offset = 0x4, fixed_abs, tag = 'smem constant byte address 0x4 - core index']
  #allocation1 [shape = 'u32[144,128]{1,0:T(1,128)}', space=vmem, size = 0x12000, scoped, tag = 'internal scratch']
  #allocation2 [shape = 'f32[8,128]{1,0:T(8,128)}', space=vmem, size = 0x1000, scoped, tag = 'scratch operand']
  %s0 = inlined_call_operand.hbm [shape: f32[16,128], index: 0, kind: input, shape index: {}]
  %s1 = inlined_call_operand.hbm [shape: f32[16,128], index: 1, kind: input, shape index: {}]
  %s2 = inlined_call_operand.hbm [shape: f32[1,1], index: 2, kind: output, shape index: {}]
  %s3 = sld [smem:[#allocation0]]
  $region38: #{tpu_custom_call.1} parent=0
    _
  %s5 = ssub.s32 1, %s3
  %s6 = scalar_select 0, %s5, %s3
  $region1: #{tpu_custom_call.1} parent=0
    #allocation3 [shape = 'u8[8192]{0}', space=vmem, size = 0x2000, scoped, tag = 'input window, operand 0, single buffered']
    #allocation4 [shape = 's32[1]{0}', space=sflag, size = 0x4, scoped, tag = 'scoped memory for tpu_custom_call.1']
    #allocation5 [shape = 's32[1]{0}', space=sflag, size = 0x4, scoped, tag = 'scoped memory for tpu_custom_call.1']
    #allocation6 [shape = 'u8[8192]{0}', space=vmem, size = 0x2000, scoped, tag = 'input window, operand 1, single buffered']
    #allocation7 [shape = 's32[1]{0}', space=sflag, size = 0x4, scoped, tag = 'scoped memory for tpu_custom_call.1']
    #allocation8 [shape = 'u8[512]{0}', space=vmem, size = 0x400, scoped, tag = 'output window, operand 0, single buffered']
    %7 = vsyncpa [#allocation4], 0
    %8 = vsyncpa [#allocation7], 0
    %9 = vsyncpa [#allocation5], 0
    // Predicated region
    $region2: #{tpu_custom_call.1} parent=1 // pred_check
      _
    $region3: #{tpu_custom_call.1} parent=1 // pred_check_branch
      %11 = sbr.rel (0) target = $region5
    $region4: #{tpu_custom_call.1} parent=1 // pred_region
      %s13 = ssub.s32 256, 256
      %14 = vsyncadd [#allocation4], %s13
      %s15 = sshll.u32 [#allocation3], 4
      %s16 = int_to_ptr.vmem [resolvable:$true] %s15
      %21 = dma.hbm_to_vmem [thread:$0]  %s0, 256, %s16, [#allocation4], 128, 128, 8
    $region5: #{tpu_custom_call.1} parent=1 // pred_fallthru
      _
    // Predicated region
    $region6: #{tpu_custom_call.1} parent=1 // pred_check
      _
    $region7: #{tpu_custom_call.1} parent=1 // pred_check_branch
      %23 = sbr.rel (0) target = $region9
    $region8: #{tpu_custom_call.1} parent=1 // pred_region
      %s25 = ssub.s32 256, 256
      %26 = vsyncadd [#allocation7], %s25
      %s27 = sshll.u32 [#allocation6], 4
      %s28 = int_to_ptr.vmem [resolvable:$true] %s27
      %33 = dma.hbm_to_vmem [thread:$0]  %s1, 256, %s28, [#allocation7], 128, 128, 8
    $region9: #{tpu_custom_call.1} parent=1 // pred_fallthru
      _
    // Predicated region
    $region10: #{tpu_custom_call.1} parent=1 // pred_check
      _
    $region11: #{tpu_custom_call.1} parent=1 // pred_check_branch
      %35 = sbr.rel (0) target = $region13
    $region12: #{tpu_custom_call.1} parent=1 // pred_region
      %36 = dma.done [#allocation4], 256
    $region13: #{tpu_custom_call.1} parent=1 // pred_fallthru
      _
    // Predicated region
    $region14: #{tpu_custom_call.1} parent=1 // pred_check
      _
    $region15: #{tpu_custom_call.1} parent=1 // pred_check_branch
      %38 = sbr.rel (0) target = $region17
    $region16: #{tpu_custom_call.1} parent=1 // pred_region
      %39 = dma.done [#allocation7], 256
    $region17: #{tpu_custom_call.1} parent=1 // pred_fallthru
      _
    %p40 = scmp.eq.s32.totalorder 0, 0
    // Predicated region
    $region18: #{tpu_custom_call.1} parent=1 // pred_check
      %p41 = pneg %p40
    $region19: #{tpu_custom_call.1} parent=1 // pred_check_branch
      %43 = sbr.rel (%p41) target = $region21
    $region20: #{tpu_custom_call.1} parent=1 // pred_region
      %44 = vst [vmem:[#allocation2] sm:$0xff] 0.0
    $region21: #{tpu_custom_call.1} parent=1 // pred_fallthru
      _
    %v45 = vld [vmem:[#allocation3] sm:$0xff]
    %v46 = vld [vmem:[#allocation3 + $0x8] sm:$0xff]
    %v47 = vld [vmem:[#allocation6] sm:$0xff]
    %v48 = vld [vmem:[#allocation6 + $0x8] sm:$0xff]
    %v49 = vand.u32 2147483647, %v45
    %v50 = vand.u32 2147483647, %v46
    %v51 = vsub.f32 0.0, %v49
    %v52 = vsub.f32 0.0, %v50
    %v53 = vmul.f32 %v51, 1.442695
    %v54 = vpow.pop %v53
    %v55 = vmul.f32 %v52, 1.442695
    %v56 = vpow.pop %v55
    %v57 = vmax.f32 %v45, 0.0
    %v58 = vmax.f32 %v46, 0.0
    %v59 = vmul.f32 %v45, %v47
    %v60 = vmul.f32 %v46, %v48
    %v61 = vsub.f32 %v57, %v59
    %v62 = vsub.f32 %v58, %v60
    %v63 = vadd.f32 %v54, 1.0
    %v64 = vlog2.pop %v63
    %v65 = vmul.f32 %v64, 0.6931472
    %v66 = vmul.f32 -0.5, %v54
    %v67 = vadd.f32 %v66, 1.0
    %v68 = vmul.f32 %v67, %v54
    %v69 = vand.u32 2147483647, %v54
    %vm70 = vcmp.lt.f32.partialorder %v69, 0.0004427343
    %v71 = vsel %vm70, %v68, %v65
    %v72 = vadd.f32 %v56, 1.0
    %v73 = vlog2.pop %v72
    %v74 = vmul.f32 %v73, 0.6931472
    %v75 = vmul.f32 -0.5, %v56
    %v76 = vadd.f32 %v75, 1.0
    %v77 = vmul.f32 %v76, %v56
    %v78 = vand.u32 2147483647, %v56
    %vm79 = vcmp.lt.f32.partialorder %v78, 0.0004427343
    %v80 = vsel %vm79, %v77, %v74
    %v81 = vadd.f32 %v61, %v71
    %v82 = vadd.f32 %v62, %v80
    %v83 = vadd.f32 %v54, 1.0
    %v84 = vadd.f32 %v56, 1.0
    %v85 = vrcp.pop %v83
    %v86 = vmul.f32 1.0, %v85
    %v87 = vrcp.pop %v84
    %v88 = vmul.f32 1.0, %v87
    %vm89 = vcmp.ge.f32.partialorder %v45, 0.0
    %vm90 = vcmp.ge.f32.partialorder %v46, 0.0
    %v91 = vmul.f32 %v54, %v86
    %v92 = vmul.f32 %v56, %v88
    %v93 = vsel %vm89, %v86, %v91
    %v94 = vsel %vm90, %v88, %v92
    %v95 = vsub.f32 %v93, %v47
    %v96 = vsub.f32 %v94, %v48
    %v97 = vsub.f32 %v95, 1.0
    %v98 = vsub.f32 %v96, 1.0
    %v99 = vmul.f32 %v97, 19.96008
    %v100 = vmul.f32 %v98, 19.96008
    %v101 = vmul.f32 %v99, 1.442695
    %v102 = vpow.pop %v101
    %v103 = vmul.f32 %v100, 1.442695
    %v104 = vpow.pop %v103
    %v105 = vsub.f32 1.0, %v102
    %v106 = vsub.f32 1.0, %v104
    %v107 = vmul.f32 %v81, %v105
    %v108 = vmul.f32 %v82, %v106
    %p109 = scmp.lt.s32.totalorder 0, 0
    // Predicated region
    $region22: #{tpu_custom_call.1} parent=1 // pred_check
      %p110 = pneg %p109
    $region23: #{tpu_custom_call.1} parent=1 // pred_check_branch
      %112 = sbr.rel (%p110) target = $region25
    $region24: #{tpu_custom_call.1} parent=1 // pred_region
      %v113 = vld [vmem:[#allocation2] sm:$0xff]
      %v114 = vadd.f32 %v107, %v108
      %v115 = vadd.f32 %v113, %v114
      %116 = vst [vmem:[#allocation2] sm:$0xff] %v115
    $region25: #{tpu_custom_call.1} parent=1 // pred_fallthru
      _
    // Predicated region
    $region26: #{tpu_custom_call.1} parent=1 // pred_check
      %p117 = pneg %p40
    $region27: #{tpu_custom_call.1} parent=1 // pred_check_branch
      %119 = sbr.rel (%p117) target = $region29
    $region28: #{tpu_custom_call.1} parent=1 // pred_region
      %v120 = vlaneseq
      %v121 = vshrl.u32 %v120, 7
      %v122 = vadd.s32 %v121, 8
      %v123 = vlaneseq
      %v124 = vand.u32 %v123, 127
      %s125 = smul.u32 0, 16
      %v126 = vstv %s125
      %v127 = vadd.s32 %v126, %v121
      %v128 = vadd.s32 %v126, %v122
      %v129 = vmul.u32 %v127, 128
      %v130 = vmul.u32 %v128, 128
      %v131 = vadd.s32 %v129, %v124
      %v132 = vadd.s32 %v130, %v124
      %vm133 = vcmp.lt.s32.totalorder %v131, 2048
      %vm134 = vcmp.lt.s32.totalorder %v132, 2048
      %v135 = vsel %vm133, %v107, 0.0
      %v136 = vsel %vm134, %v108, 0.0
      %v137 = vld [vmem:[#allocation2] sm:$0xff]
      %v138 = vadd.f32 %v135, %v136
      %v139 = vadd.f32 %v137, %v138
      %140 = vst [vmem:[#allocation2] sm:$0xff] %v139
      %v141 = vld [vmem:[#allocation2] sm:$0xff]
      %142 = vadd.xlane.f32.xlu0 %v141
      %v143 = vpop.xlane.xlu0 %142
      %v144 = vrot.slane %v143, 4
      %v145 = vadd.f32 %v143, %v144
      %v146 = vrot.slane %v145, 2
      %v147 = vadd.f32 %v145, %v146
      %v148 = vrot.slane %v147, 1
      %v149 = vadd.f32 %v147, %v148
      %s150 = vtos %v149
      %v151 = vstv %s150
      %v152 = vmul.f32 %v151, 0.00048828125
      %vm153 = vcmask 0
      %154 = vst.msk [vmem:[#allocation8] sm:$0x1] %vm153, %v152
    $region29: #{tpu_custom_call.1} parent=1 // pred_fallthru
      _
    // Predicated region
    $region30: #{tpu_custom_call.1} parent=1 // pred_check
      _
    $region31: #{tpu_custom_call.1} parent=1 // pred_check_branch
      %156 = sbr.rel (0) target = $region33
    $region32: #{tpu_custom_call.1} parent=1 // pred_region
      %s158 = ssub.s32 16, 16
      %159 = vsyncadd [#allocation5], %s158
      %s161 = sshll.u32 [#allocation8], 4
      %s162 = int_to_ptr.vmem [resolvable:$true] %s161
      %164 = dma.vmem_to_hbm [thread:$0]  %s162, 16, %s2, [#allocation5]
    $region33: #{tpu_custom_call.1} parent=1 // pred_fallthru
      _
    // Predicated region
    $region34: #{tpu_custom_call.1} parent=1 // pred_check
      _
    $region35: #{tpu_custom_call.1} parent=1 // pred_check_branch
      %166 = sbr.rel (0) target = $region37
    $region36: #{tpu_custom_call.1} parent=1 // pred_region
      %167 = dma.done [#allocation5], 16
    $region37: #{tpu_custom_call.1} parent=1 // pred_fallthru
      _
    %168 = vsyncpa [#allocation4], 1
    %169 = vsyncpa [#allocation7], 1
    %170 = vsyncpa [#allocation5], 1

</llo_original>
